<compile_context>
chip_gen: v7x
topology: tpu7x:2x2x1
jax: 0.10.0
libtpu: 0.0.40
codegen_flags: <defaults>
</compile_context>

<pallas_src>
import functools
import math

import jax
import jax.numpy as jnp
from jax.experimental import pallas as pl
from jax.experimental.pallas import tpu as pltpu

_LANES = 128          # vreg lane width
_TR_TARGET = 1024     # target rows (of 128 lanes) per tile; f32 -> 512 KiB/buffer


def _round_up(n, m):
    return ((n + m - 1) // m) * m


def _dropconnect_kernel(mask_ref, x_ref, o_ref, *, inv_keep):
    """mask_ref: (B,) int32 in SMEM (scalar prefetch), one keep bit per sample.
    x_ref/o_ref: (1, TR, 128) tiles of the flattened, lane-dense input/output."""
    b = pl.program_id(0)
    # Per-sample scale: 0.0 (dropped) or 1/keep (kept). One scalar SMEM read
    # per tile; all the randomness was hoisted out of the kernel entirely.
    scale = mask_ref[b].astype(jnp.float32) * jnp.float32(inv_keep)
    # Multiply in the native dtype (no f32 upcast of the tensor data).
    o_ref[...] = x_ref[...] * scale.astype(o_ref.dtype)


@functools.partial(jax.jit, static_argnames=("keep_prob",))
def _drop_connect_apply(x, mask, keep_prob):
    B = x.shape[0]
    orig_shape = x.shape
    L = math.prod(orig_shape[1:])

    # Lane-dense layout: (B, rows, 128). Pad rows up so the tile divides evenly.
    rows = _round_up(pl.cdiv(L, _LANES), 8)
    tr = min(_TR_TARGET, rows)           # multiple of 8 by construction
    rows_pad = _round_up(rows, tr)
    l_pad = rows_pad * _LANES

    x_flat = x.reshape(B, L)
    if l_pad != L:
        x_flat = jnp.pad(x_flat, ((0, 0), (0, l_pad - L)))
    x3 = x_flat.reshape(B, rows_pad, _LANES)

    kernel = functools.partial(_dropconnect_kernel, inv_keep=1.0 / keep_prob)

    out3 = pl.pallas_call(
        kernel,
        out_shape=jax.ShapeDtypeStruct(x3.shape, x.dtype),
        grid_spec=pltpu.PrefetchScalarGridSpec(
            num_scalar_prefetch=1,                      # mask -> SMEM
            grid=(B, rows_pad // tr),                   # (sample, tile-in-sample)
            in_specs=[
                pl.BlockSpec((1, tr, _LANES), lambda b, t, mask_ref: (b, t, 0)),
            ],
            out_specs=pl.BlockSpec((1, tr, _LANES), lambda b, t, mask_ref: (b, t, 0)),
        ),
        compiler_params=pltpu.CompilerParams(
            # Batch axis is independent (mask drawn outside the kernel) ->
            # megacore-shardable on v7x; inner tile axis is a plain loop.
            dimension_semantics=("parallel", "arbitrary"),
        ),
        # x3 (call-arg index 1, after the scalar-prefetch mask) is an internal
        # padded temporary, so the output can be written in place.
        input_output_aliases={1: 0},
    )(mask, x3)

    out = out3.reshape(B, l_pad)[:, :L].reshape(orig_shape)
    return out


def drop_connect(x, key, ratio, training=True):
    """DropConnect forward. x: (B, ...) array, key: jax PRNG key, ratio: drop prob."""
    if not training:
        return x
    keep_prob = float(1.0 - ratio)
    if keep_prob <= 0.0:
        # ratio == 1.0 would divide by zero (NaN in the PyTorch module too).
        raise ValueError("DropConnect ratio must be < 1.0 so keep_prob > 0.")
    B = x.shape[0]
    # Same distribution as torch.rand([B,1,1,1]): one uniform draw per sample.
    # (Not bit-identical to torch's RNG stream, but identical semantics.)
    u = jax.random.uniform(key, (B,), dtype=jnp.float32)
    mask = jnp.floor(jnp.float32(keep_prob) + u).astype(jnp.int32)  # 0 or 1
    return _drop_connect_apply(x, mask, keep_prob)


if __name__ == "__main__":
    key = jax.random.PRNGKey(0)
    k_x, k_drop, k_x2 = jax.random.split(key, 3)

    B, C, H, W = 2, 4, 16, 16
    x = jax.random.normal(k_x, (B, C, H, W), dtype=jnp.float32)

    ratio = 0.2  # drop probability; keep_prob = 0.8
    keep_prob = 1.0 - ratio

    out = drop_connect(x, k_drop, ratio, training=True)
    out = jax.block_until_ready(out)
    assert out.shape == x.shape and out.dtype == x.dtype

    # Eval mode is a passthrough.
    out_eval = drop_connect(x, k_drop, ratio, training=False)
    assert bool(jnp.array_equal(out_eval, x))

    # Every sample is either all-zero or x / keep_prob for that sample.
    ok = True
    for b in range(B):
        zero_ok = bool(jnp.allclose(out[b], 0.0))
        scaled_ok = bool(jnp.allclose(out[b], x[b] / keep_prob, rtol=1e-5, atol=1e-5))
        ok = ok and (zero_ok or scaled_ok)
    assert ok, "DropConnect output is neither zeroed nor correctly scaled"

    # Padding path: a shape whose flattened size is not a multiple of 128.
    # ratio=0 => keep mask is always 1 => output must equal input exactly.
    x_odd = jax.random.normal(k_x2, (2, 3, 5, 7), dtype=jnp.float32)
    out_odd = jax.block_until_ready(drop_connect(x_odd, k_drop, 0.0, training=True))
    assert bool(jnp.allclose(out_odd, x_odd, rtol=1e-6, atol=1e-6)), "padding path mismatch"

    print("KERNEL_OK")
</pallas_src>

<mosaic_0001>
module attributes {stable_mosaic.version = 11 : i64} {
  func.func @_dropconnect_kernel(%arg0: i32, %arg1: i32, %arg2: memref<2xi32, #tpu.memory_space<smem>>, %arg3: memref<1x8x128xf32, #tpu.memory_space<vmem>>, %arg4: memref<1x8x128xf32, #tpu.memory_space<vmem>>) attributes {dimension_semantics = [#tpu.dimension_semantics<parallel>, #tpu.dimension_semantics<arbitrary>], iteration_bounds = array<i64: 2, 1>, scalar_prefetch = 1 : i64, scratch_operands = 0 : i64, tpu.core_type = #tpu.core_type<tc>, window_params = [{transform_indices = @transform_0, window_bounds = array<i64: 1, 8, 128>}, {transform_indices = @transform_1, window_bounds = array<i64: 1, 8, 128>}]} {
    %0 = arith.index_cast %arg0 : i32 to index
    %1 = memref.load %arg2[%0] : memref<2xi32, #tpu.memory_space<smem>>
    %2 = arith.sitofp %1 : i32 to f32
    %cst = arith.constant 1.250000e+00 : f32
    %3 = arith.mulf %2, %cst : f32
    %c0 = arith.constant 0 : index
    %c0_0 = arith.constant 0 : index
    %c0_1 = arith.constant 0 : index
    %4 = vector.load %arg3[%c0, %c0_0, %c0_1] : memref<1x8x128xf32, #tpu.memory_space<vmem>>, vector<1x8x128xf32>
    %5 = vector.broadcast %3 : f32 to vector<1x8x128xf32>
    %6 = arith.mulf %4, %5 : vector<1x8x128xf32>
    %c0_2 = arith.constant 0 : index
    %c0_3 = arith.constant 0 : index
    %c0_4 = arith.constant 0 : index
    %7 = vector.load %arg4[%c0_2, %c0_3, %c0_4] : memref<1x8x128xf32, #tpu.memory_space<vmem>>, vector<1x8x128xf32>
    tpu.vector_store %arg4[%c0_2, %c0_3, %c0_4], %6 {strides = array<i32>} : memref<1x8x128xf32, #tpu.memory_space<vmem>>, vector<1x8x128xf32>,
    return
  }
  func.func @transform_0(%arg0: i32, %arg1: i32, %arg2: memref<2xi32, #tpu.memory_space<smem>>) -> (i32, i32, i32) {
    %c0_i32 = arith.constant 0 : i32
    %c0_i32_0 = arith.constant 0 : i32
    return %arg0, %arg1, %c0_i32 : i32, i32, i32
  }
  func.func @transform_1(%arg0: i32, %arg1: i32, %arg2: memref<2xi32, #tpu.memory_space<smem>>) -> (i32, i32, i32) {
    %c0_i32 = arith.constant 0 : i32
    %c0_i32_0 = arith.constant 0 : i32
    return %arg0, %arg1, %c0_i32 : i32, i32, i32
  }
}

</mosaic_0001>

<llo_original>
// kernel: _drop_connect_apply.1
$region0: #{_drop_connect_apply.1}
  #allocation0 [shape = 'u32[]', space=smem, size = 0x4, offset = 0x4, fixed_abs, tag = 'smem constant byte address 0x4 - core index']
  #allocation1 [shape = 'u32[144,128]{1,0:T(1,128)}', space=vmem, size = 0x12000, scoped, tag = 'internal scratch']
  #allocation2 [shape = 's32[1]{0}', space=sflag, size = 0x4, scoped, tag = 'scoped memory for _drop_connect_apply.1']
  #allocation3 [shape = 'u8[512]{0}', space=smem, size = 0x200, scoped, tag = 'prefetched SMEM operand 0']
  %s0 = inlined_call_operand.vmem [shape: s32[2], index: 0, kind: input, shape index: {}]
  %s1 = inlined_call_operand.vmem [shape: f32[2,8,128], index: 1, kind: input, shape index: {}, may-alias: {1,2}]
  %s2 = inlined_call_operand.vmem [shape: f32[2,8,128], index: 2, kind: output, shape index: {}, may-alias: {1,2}]
  %s3 = sld [smem:[#allocation0]]
  $region37: #{_drop_connect_apply.1} parent=0
    _
  %s5 = ssub.s32 1, %s3
  %s6 = scalar_select 0, %s5, %s3
  %s7 = sshll.u32 %s0, 4
  %s8 = int_to_ptr.vmem [resolvable:$true] %s7
  %10 = dma.vmem_to_smem %s8, 16, [#allocation3], [#allocation2]
  %11 = dma.done [#allocation2], 16
  %12 = sfence
  loop: start=0, step=1, limit=4
  $region2: #{_drop_connect_apply.1} parent=0 // loop_pre_header
    _
  $region3: #{_drop_connect_apply.1} parent=0 // loop_header
    %s14 = sphi 0, %s18
    %p15 = scmp.ge.s32.totalorder %s14, 4
    %s21 = sphi 0, %s33
    %s22 = sphi 0, %s29
    %s23 = sphi 0, %s21
    %s24 = sphi 0, %s22
    %s25 = sphi 0, %s23
    %s26 = sphi 0, %s24
    %s38 = sphi 0, %s40
    %s41 = sphi 0, %s38
    %s42 = sphi 0, %s41
    %s58 = sphi 0, %s42
    %s66 = sphi 0, %s68
    %s69 = sphi 0, %s66
    %s70 = sphi 0, %s69
    %s86 = sphi 0, %s70
  $region4: #{_drop_connect_apply.1} parent=0 // loop_header_branch
    %17 = sbr.rel (%p15) target = $region8
  $region5: #{_drop_connect_apply.1} parent=0 // loop_body
    %s19 = ssub.s32 %s14, 1
    %s20 = ssub.s32 %s14, 2
    %s27 = sadd.s32 1, %s22
    %p28 = scmp.ge.s32.totalorder %s27, 1
    %s29 = scalar_select %p28, 0, %s27
    %s30 = sadd.s32 1, %s21
    %s31 = scalar_select %p28, %s30, %s21
    %p32 = scmp.ge.s32.totalorder %s31, 2
    %s33 = scalar_select %p32, 0, %s31
    %s34 = ssub.s32 %s21, %s33
    %s35 = ssub.s32 %s22, %s29
    %s36 = sor.u32 %s34, %s35
    %p37 = scmp.eq.s32.totalorder %s36, 0
    %s39 = sadd.s32 %s38, 1
    %s40 = scalar_select %p37, %s38, %s39
    %p43 = pneg %p37
    %p44 = scmp.eq.s32.totalorder %s14, 1
    %p45 = por %p43, %p44
    %p46 = scmp.ne.s32.totalorder %s38, %s41
    %p47 = scmp.eq.s32.totalorder %s14, 0
    %p48 = por %p46, %p47
    %p49 = scmp.ne.s32.totalorder %s38, %s41
    %p50 = scmp.eq.s32.totalorder %s19, 1
    %p51 = por %p49, %p50
    %p52 = scmp.ne.s32.totalorder %s41, %s42
    %p53 = scmp.eq.s32.totalorder %s19, 0
    %p54 = por %p52, %p53
    %p55 = scmp.ne.s32.totalorder %s41, %s42
    %p56 = scmp.eq.s32.totalorder %s20, 1
    %p57 = por %p55, %p56
    %p59 = scmp.ne.s32.totalorder %s42, %s58
    %p60 = scmp.eq.s32.totalorder %s20, 0
    %p61 = por %p59, %p60
    %s62 = ssub.s32 %s21, %s33
    %s63 = ssub.s32 %s22, %s29
    %s64 = sor.u32 %s62, %s63
    %p65 = scmp.eq.s32.totalorder %s64, 0
    %s67 = sadd.s32 %s66, 1
    %s68 = scalar_select %p65, %s66, %s67
    %p71 = pneg %p65
    %p72 = scmp.eq.s32.totalorder %s14, 1
    %p73 = por %p71, %p72
    %p74 = scmp.ne.s32.totalorder %s66, %s69
    %p75 = scmp.eq.s32.totalorder %s14, 0
    %p76 = por %p74, %p75
    %p77 = scmp.ne.s32.totalorder %s66, %s69
    %p78 = scmp.eq.s32.totalorder %s19, 1
    %p79 = por %p77, %p78
    %p80 = scmp.ne.s32.totalorder %s69, %s70
    %p81 = scmp.eq.s32.totalorder %s19, 0
    %p82 = por %p80, %p81
    %p83 = scmp.ne.s32.totalorder %s69, %s70
    %p84 = scmp.eq.s32.totalorder %s20, 1
    %p85 = por %p83, %p84
    %p87 = scmp.ne.s32.totalorder %s70, %s86
    %p88 = scmp.eq.s32.totalorder %s20, 0
    %p89 = por %p87, %p88
    %p90 = scmp.le.s32.totalorder 1, %s14
    %p91 = scmp.lt.s32.totalorder %s14, 3
    %p92 = pnand %p90, %p91
    %p93 = pneg %p92
    // Predicated region
    $region9: #{_drop_connect_apply.1} parent=5 // pred_check
      _
    $region10: #{_drop_connect_apply.1} parent=5 // pred_check_branch
      %95 = sbr.rel (%p92) target = $region12
    $region11: #{_drop_connect_apply.1} parent=5 // pred_region
      %s96 = ssub.s32 %s14, 1
    $region12: #{_drop_connect_apply.1} parent=5 // pred_fallthru
      _
    %p97 = scmp.lt.s32.totalorder %s14, 2
    // Predicated region
    $region13: #{_drop_connect_apply.1} parent=5 // pred_check
      %p98 = pneg %p97
    $region14: #{_drop_connect_apply.1} parent=5 // pred_check_branch
      %100 = sbr.rel (%p98) target = $region16
    $region15: #{_drop_connect_apply.1} parent=5 // pred_region
      // Predicated region
      $region17: #{_drop_connect_apply.1} parent=15 // pred_check
        %p101 = pneg %p48
      $region18: #{_drop_connect_apply.1} parent=15 // pred_check_branch
        %103 = sbr.rel (%p101) target = $region20
      $region19: #{_drop_connect_apply.1} parent=15 // pred_region
        %p104 = scmp.lt.s32.totalorder %s21, 1
        %s105 = scalar_select %p104, %s21, 1
        %p106 = scmp.lt.s32.totalorder %s22, 0
        %s107 = scalar_select %p106, %s22, 0
        %s108 = sadd.s32 %s107, %s105
        %s109 = smul.addr %s108, 8
        %s110 = scalar_lea.vmem %s1, %s109
      $region20: #{_drop_connect_apply.1} parent=15 // pred_fallthru
        _
    $region16: #{_drop_connect_apply.1} parent=5 // pred_fallthru
      _
    %p111 = scmp.le.s32.totalorder 1, %s14
    %p112 = scmp.lt.s32.totalorder %s14, 3
    %p113 = pnand %p111, %p112
    %p114 = pneg %p113
    // Predicated region
    $region21: #{_drop_connect_apply.1} parent=5 // pred_check
      _
    $region22: #{_drop_connect_apply.1} parent=5 // pred_check_branch
      %116 = sbr.rel (%p113) target = $region24
    $region23: #{_drop_connect_apply.1} parent=5 // pred_region
      %s117 = ssub.s32 %s14, 1
      %p118 = scmp.lt.s32.totalorder %s23, 1
      %s119 = scalar_select %p118, %s23, 1
      %p120 = scmp.lt.s32.totalorder %s24, 0
      %s121 = scalar_select %p120, %s24, 0
      %s122 = sadd.s32 %s121, %s119
      %s123 = smul.addr %s122, 8
      %s124 = scalar_lea.vmem %s1, %s123
      %p125 = pneg %p54
      %p126 = pneg %p51
      %p127 = pneg %p82
      %p128 = pneg %p79
      %p129 = scmp.lt.s32.totalorder %s23, 1
      %s130 = scalar_select %p129, %s23, 1
      %p131 = scmp.lt.s32.totalorder %s24, 0
      %s132 = scalar_select %p131, %s24, 0
      %s133 = sadd.s32 %s132, %s130
      %s134 = smul.addr %s133, 8
      %s135 = scalar_lea.vmem %s2, %s134
      %p136 = scmp.lt.s32.totalorder %s23, 1
      %s137 = scalar_select %p136, %s23, 1
      %p138 = scmp.lt.s32.totalorder %s24, 0
      %s139 = scalar_select %p138, %s24, 0
      %s140 = sadd.s32 %s139, %s137
      %s141 = smul.addr %s140, 8
      %s142 = scalar_lea.vmem %s1, %s141
      %p143 = scmp.lt.s32.totalorder %s23, 1
      %s144 = scalar_select %p143, %s23, 1
      %p145 = scmp.lt.s32.totalorder %s24, 0
      %s146 = scalar_select %p145, %s24, 0
      %s147 = sadd.s32 %s146, %s144
      %s148 = smul.addr %s147, 8
      %s149 = scalar_lea.vmem %s2, %s148
      %s150 = sld [smem:[#allocation3 + %s23]]
      %s151 = scvt.s32.f32 %s150
      %s152 = smul.f32 %s151, 1.25
      %v153 = vld [vmem:[%s142] sm:$0xff]
      %v154 = vstv %s152
      %v155 = vmul.f32 %v153, %v154
      %156 = vst [vmem:[%s149] sm:$0xff] %v155
      %p157 = scmp.lt.s32.totalorder %s23, 1
      %s158 = scalar_select %p157, %s23, 1
      %p159 = scmp.lt.s32.totalorder %s24, 0
      %s160 = scalar_select %p159, %s24, 0
      %s161 = sadd.s32 %s160, %s158
      %s162 = smul.addr %s161, 8
      %s163 = scalar_lea.vmem %s2, %s162
      // Predicated region
      $region25: #{_drop_connect_apply.1} parent=23 // pred_check
        %p164 = pneg %p79
      $region26: #{_drop_connect_apply.1} parent=23 // pred_check_branch
        %166 = sbr.rel (%p164) target = $region28
      $region27: #{_drop_connect_apply.1} parent=23 // pred_region
        _
      $region28: #{_drop_connect_apply.1} parent=23 // pred_fallthru
        _
    $region24: #{_drop_connect_apply.1} parent=5 // pred_fallthru
      _
    %p167 = scmp.le.s32.totalorder 2, %s14
    // Predicated region
    $region29: #{_drop_connect_apply.1} parent=5 // pred_check
      %p168 = pneg %p167
    $region30: #{_drop_connect_apply.1} parent=5 // pred_check_branch
      %170 = sbr.rel (%p168) target = $region32
    $region31: #{_drop_connect_apply.1} parent=5 // pred_region
      %s171 = ssub.s32 %s14, 2
      // Predicated region
      $region33: #{_drop_connect_apply.1} parent=31 // pred_check
        %p172 = pneg %p85
      $region34: #{_drop_connect_apply.1} parent=31 // pred_check_branch
        %174 = sbr.rel (%p172) target = $region36
      $region35: #{_drop_connect_apply.1} parent=31 // pred_region
        %p175 = scmp.lt.s32.totalorder %s25, 1
        %s176 = scalar_select %p175, %s25, 1
        %p177 = scmp.lt.s32.totalorder %s26, 0
        %s178 = scalar_select %p177, %s26, 0
        %s179 = sadd.s32 %s178, %s176
        %s180 = smul.addr %s179, 8
        %s181 = scalar_lea.vmem %s2, %s180
      $region36: #{_drop_connect_apply.1} parent=31 // pred_fallthru
        _
    $region32: #{_drop_connect_apply.1} parent=5 // pred_fallthru
      _
  $region6: #{_drop_connect_apply.1} parent=0 // loop_footer
    %s18 = sadd.s32 1, %s14
  $region7: #{_drop_connect_apply.1} parent=0 // loop_footer_branch
    %13 = sbr.rel target = $region3
  $region8: #{_drop_connect_apply.1} parent=0 // loop_exit
    _

</llo_original>
